<compile_context>
chip_gen: v7x
topology: tpu7x:2x2x1
jax: 0.10.0
libtpu: 0.0.40
codegen_flags: <defaults>
</compile_context>

<pallas_src>
import jax
import jax.numpy as jnp
from jax.experimental import pallas as pl
from jax.experimental.pallas import tpu as pltpu

F = 128     # n_features
K = 13      # n_features_out
EPS = 1e-5  # torch.nn.LayerNorm default eps


def _round_up(x, m):
    return ((x + m - 1) // m) * m


def _silu(x):
    return x * jax.nn.sigmoid(x)


def _layernorm_1pass(x, gamma, beta):
    # single-pass stats: var = E[x^2] - mu^2 (f32, fine at these magnitudes)
    mu = jnp.mean(x, axis=-1, keepdims=True)
    ms = jnp.mean(x * x, axis=-1, keepdims=True)
    var = ms - mu * mu
    return (x - mu) * jax.lax.rsqrt(var + EPS) * gamma + beta


def readout_kernel(h_ref, e_ref,
                   w1_ref, b1_ref, g1_ref, be1_ref,
                   w2_ref, b2_ref, g2_ref, be2_ref,
                   wh_ref, bh_ref,
                   wv_ref, cv_ref,
                   out_ref):
    mm = w1_ref.dtype  # matmul operand dtype (f32 or bf16); accumulation is f32

    # --- MLP on invariant node features ---------------------------------
    h = h_ref[...]                                                    # (TN, F)
    x = jnp.dot(h.astype(mm), w1_ref[...],
                preferred_element_type=jnp.float32) + b1_ref[...]
    x = _silu(_layernorm_1pass(x, g1_ref[...], be1_ref[...]))
    x = jnp.dot(x.astype(mm), w2_ref[...],
                preferred_element_type=jnp.float32) + b2_ref[...]
    x = _silu(_layernorm_1pass(x, g2_ref[...], be2_ref[...]))

    # --- fused head: lanes [0:K] = invariant out, lanes [K:4K] = gates ---
    # (gate columns are pre-expanded so each gate repeats over its 3 spatial
    #  columns -> the gate broadcast is free)
    y = jnp.dot(x.astype(mm), wh_ref[...],
                preferred_element_type=jnp.float32) + bh_ref[...]      # (TN, 4K)

    # --- EquivariantLinear on the flattened (F*3) lane axis --------------
    # wv_ref lanes [0:K] are zero-weight + ones-bias so y*v passes inv through;
    # lanes [K:4K] hold the kron-expanded equivariant weight.
    v = jnp.dot(e_ref[...].astype(mm), wv_ref[...],
                preferred_element_type=jnp.float32) + cv_ref[...]      # (TN, 4K)

    out_ref[...] = (y * v).astype(out_ref.dtype)                       # (TN, 4K)


def readout_forward(h, e_pt, params, *, tn=512, matmul_dtype=jnp.float32):
    """h: [N, F] float32; e_pt: [N, F, 3] float32 (PyTorch layout)."""
    N = h.shape[0]
    (w1, b1, g1, be1, w2, b2, g2, be2, w3i, b3i, w3g, b3g, wv) = params
    f32 = jnp.float32

    # ---- tiny one-time weight refolds (done outside the kernel) ---------
    # gate-expansion matrix: (K, 3K), column 3k+d has a 1 at row k
    expand = jnp.kron(jnp.eye(K, dtype=f32), jnp.ones((1, 3), dtype=f32))
    wh = jnp.concatenate([w3i, w3g @ expand], axis=1)                    # (F, 4K)
    bh = jnp.concatenate([b3i, b3g @ expand], axis=1)                    # (1, 4K)
    # equivariant weight expanded for the flattened (f*3+d) lane axis
    wv_exp = jnp.kron(wv, jnp.eye(3, dtype=f32))                         # (3F, 3K)
    wv_full = jnp.concatenate(
        [jnp.zeros((3 * F, K), f32), wv_exp], axis=1)                    # (3F, 4K)
    cv = jnp.concatenate(
        [jnp.ones((1, K), f32), jnp.zeros((1, 3 * K), f32)], axis=1)     # (1, 4K)

    w1m = w1.astype(matmul_dtype)
    w2m = w2.astype(matmul_dtype)
    whm = wh.astype(matmul_dtype)
    wvm = wv_full.astype(matmul_dtype)

    # (N, F, 3) -> (N, 3F): free row-major reshape, no HBM transpose of e.
    e_flat = e_pt.reshape(N, 3 * F)

    # ---- tiling: big node tiles, pad the tail instead of asserting ------
    tn = min(_round_up(max(tn, 8), 8), _round_up(N, 8))
    Np = _round_up(N, tn)
    if Np != N:
        h = jnp.pad(h, ((0, Np - N), (0, 0)))
        e_flat = jnp.pad(e_flat, ((0, Np - N), (0, 0)))

    def full_spec(shape):
        n = len(shape)
        return pl.BlockSpec(shape, lambda i, _n=n: (0,) * _n)

    out_slab = pl.pallas_call(
        readout_kernel,
        out_shape=jax.ShapeDtypeStruct((Np, 4 * K), jnp.float32),
        grid_spec=pltpu.PrefetchScalarGridSpec(
            num_scalar_prefetch=0,
            grid=(Np // tn,),
            in_specs=[
                pl.BlockSpec((tn, F), lambda i: (i, 0)),          # h
                pl.BlockSpec((tn, 3 * F), lambda i: (i, 0)),      # e (flattened)
                full_spec((F, F)), full_spec((1, F)), full_spec((1, F)), full_spec((1, F)),
                full_spec((F, F)), full_spec((1, F)), full_spec((1, F)), full_spec((1, F)),
                full_spec((F, 4 * K)), full_spec((1, 4 * K)),
                full_spec((3 * F, 4 * K)), full_spec((1, 4 * K)),
            ],
            out_specs=pl.BlockSpec((tn, 4 * K), lambda i: (i, 0)),
        ),
        compiler_params=pltpu.CompilerParams(
            dimension_semantics=("parallel",)),
    )(h, e_flat, w1m, b1, g1, be1, w2m, b2, g2, be2, whm, bh, wvm, cv)

    # glue: split the lane-dense slab back into PyTorch-shaped outputs.
    out_slab = out_slab[:N]
    inv_out = out_slab[:, :K]                          # (N, K)
    eq_out = out_slab[:, K:].reshape(N, K, 3)          # (N, K, 3)  free reshape
    out = eq_out[:, 0, :]                              # (N, 3)
    # TODO(synk): the PyTorch module also mutates batch.* in place; here the
    # updated features are returned instead (no mutable container in JAX).
    return out, inv_out, eq_out


# ---------------------------------------------------------------------------
# pure-JAX reference (mirrors the PyTorch forward exactly)
# ---------------------------------------------------------------------------
def _layernorm_ref(x, gamma, beta):
    mu = jnp.mean(x, axis=-1, keepdims=True)
    var = jnp.mean((x - mu) ** 2, axis=-1, keepdims=True)
    return (x - mu) * jax.lax.rsqrt(var + EPS) * gamma + beta


def readout_reference(h, e_pt, params):
    (w1, b1, g1, be1, w2, b2, g2, be2, w3i, b3i, w3g, b3g, wv) = params
    x = h @ w1 + b1
    x = _silu(_layernorm_ref(x, g1, be1))
    x = x @ w2 + b2
    x = _silu(_layernorm_ref(x, g2, be2))
    inv = x @ w3i + b3i                       # [N, K]
    gates = x @ w3g + b3g                     # [N, K]
    ve = jnp.einsum('nfd,fk->nkd', e_pt, wv)  # EquivariantLinear -> [N, K, 3]
    eq = ve * gates[:, :, None]               # multiply_first_dim
    out = eq[:, 0, :]
    return out, inv, eq


def make_params(key):
    ks = jax.random.split(key, 16)
    scale = 0.05
    w1 = scale * jax.random.normal(ks[0], (F, F), jnp.float32)
    b1 = scale * jax.random.normal(ks[1], (1, F), jnp.float32)
    g1 = 1.0 + scale * jax.random.normal(ks[2], (1, F), jnp.float32)
    be1 = scale * jax.random.normal(ks[3], (1, F), jnp.float32)
    w2 = scale * jax.random.normal(ks[4], (F, F), jnp.float32)
    b2 = scale * jax.random.normal(ks[5], (1, F), jnp.float32)
    g2 = 1.0 + scale * jax.random.normal(ks[6], (1, F), jnp.float32)
    be2 = scale * jax.random.normal(ks[7], (1, F), jnp.float32)
    w3i = scale * jax.random.normal(ks[8], (F, K), jnp.float32)
    b3i = scale * jax.random.normal(ks[9], (1, K), jnp.float32)
    w3g = scale * jax.random.normal(ks[10], (F, K), jnp.float32)
    b3g = scale * jax.random.normal(ks[11], (1, K), jnp.float32)
    wv = scale * jax.random.normal(ks[12], (F, K), jnp.float32)
    return (w1, b1, g1, be1, w2, b2, g2, be2, w3i, b3i, w3g, b3g, wv)


if __name__ == "__main__":
    key = jax.random.PRNGKey(0)
    k_h, k_e, k_p, k_h2, k_e2 = jax.random.split(key, 5)
    params = make_params(k_p)

    # Case 1: small N, single grid step (tn clamps to the padded node count).
    N1 = 16
    h1 = jax.random.normal(k_h, (N1, F), jnp.float32)
    e1 = jax.random.normal(k_e, (N1, F, 3), jnp.float32)
    out1, inv1, eq1 = jax.block_until_ready(readout_forward(h1, e1, params))
    out1_r, inv1_r, eq1_r = readout_reference(h1, e1, params)
    assert out1.shape == (N1, 3) and inv1.shape == (N1, K) and eq1.shape == (N1, K, 3)
    assert jnp.allclose(out1, out1_r, rtol=1e-4, atol=1e-4)
    assert jnp.allclose(inv1, inv1_r, rtol=1e-4, atol=1e-4)
    assert jnp.allclose(eq1, eq1_r, rtol=1e-4, atol=1e-4)

    # Case 2: N not divisible by the tile -> exercises padding + multi-step grid.
    N2 = 52
    h2 = jax.random.normal(k_h2, (N2, F), jnp.float32)
    e2 = jax.random.normal(k_e2, (N2, F, 3), jnp.float32)
    out2, inv2, eq2 = jax.block_until_ready(readout_forward(h2, e2, params, tn=16))
    out2_r, inv2_r, eq2_r = readout_reference(h2, e2, params)
    assert jnp.allclose(out2, out2_r, rtol=1e-4, atol=1e-4)
    assert jnp.allclose(inv2, inv2_r, rtol=1e-4, atol=1e-4)
    assert jnp.allclose(eq2, eq2_r, rtol=1e-4, atol=1e-4)

    # Case 3: bf16 MXU operands (v6e/v7x fast path), f32 accumulation.
    out3, inv3, eq3 = jax.block_until_ready(
        readout_forward(h1, e1, params, matmul_dtype=jnp.bfloat16))
    assert jnp.allclose(out3, out1_r, rtol=3e-2, atol=3e-2)
    assert jnp.allclose(inv3, inv1_r, rtol=3e-2, atol=3e-2)
    assert jnp.allclose(eq3, eq1_r, rtol=3e-2, atol=3e-2)

    print("KERNEL_OK")
</pallas_src>

<mosaic_0001>
module attributes {stable_mosaic.version = 11 : i64} {
  func.func @readout_kernel(%arg0: i32, %arg1: memref<16x128xf32, #tpu.memory_space<vmem>>, %arg2: memref<16x384xf32, #tpu.memory_space<vmem>>, %arg3: memref<128x128xf32, #tpu.memory_space<vmem>>, %arg4: memref<1x128xf32, #tpu.memory_space<vmem>>, %arg5: memref<1x128xf32, #tpu.memory_space<vmem>>, %arg6: memref<1x128xf32, #tpu.memory_space<vmem>>, %arg7: memref<128x128xf32, #tpu.memory_space<vmem>>, %arg8: memref<1x128xf32, #tpu.memory_space<vmem>>, %arg9: memref<1x128xf32, #tpu.memory_space<vmem>>, %arg10: memref<1x128xf32, #tpu.memory_space<vmem>>, %arg11: memref<128x52xf32, #tpu.memory_space<vmem>>, %arg12: memref<1x52xf32, #tpu.memory_space<vmem>>, %arg13: memref<384x52xf32, #tpu.memory_space<vmem>>, %arg14: memref<1x52xf32, #tpu.memory_space<vmem>>, %arg15: memref<16x52xf32, #tpu.memory_space<vmem>>) attributes {dimension_semantics = [#tpu.dimension_semantics<parallel>], iteration_bounds = array<i64: 1>, scalar_prefetch = 0 : i64, scratch_operands = 0 : i64, tpu.core_type = #tpu.core_type<tc>, window_params = [{transform_indices = @transform_0, window_bounds = array<i64: 16, 128>}, {transform_indices = @transform_1, window_bounds = array<i64: 16, 384>}, {pipeline_mode = #tpu.pipeline_mode<synchronous>, transform_indices = @transform_2, window_bounds = array<i64: 128, 128>}, {pipeline_mode = #tpu.pipeline_mode<synchronous>, transform_indices = @transform_3, window_bounds = array<i64: 1, 128>}, {pipeline_mode = #tpu.pipeline_mode<synchronous>, transform_indices = @transform_4, window_bounds = array<i64: 1, 128>}, {pipeline_mode = #tpu.pipeline_mode<synchronous>, transform_indices = @transform_5, window_bounds = array<i64: 1, 128>}, {pipeline_mode = #tpu.pipeline_mode<synchronous>, transform_indices = @transform_6, window_bounds = array<i64: 128, 128>}, {pipeline_mode = #tpu.pipeline_mode<synchronous>, transform_indices = @transform_7, window_bounds = array<i64: 1, 128>}, {pipeline_mode = #tpu.pipeline_mode<synchronous>, transform_indices = @transform_8, window_bounds = array<i64: 1, 128>}, {pipeline_mode = #tpu.pipeline_mode<synchronous>, transform_indices = @transform_9, window_bounds = array<i64: 1, 128>}, {pipeline_mode = #tpu.pipeline_mode<synchronous>, transform_indices = @transform_10, window_bounds = array<i64: 128, 52>}, {pipeline_mode = #tpu.pipeline_mode<synchronous>, transform_indices = @transform_11, window_bounds = array<i64: 1, 52>}, {pipeline_mode = #tpu.pipeline_mode<synchronous>, transform_indices = @transform_12, window_bounds = array<i64: 384, 52>}, {pipeline_mode = #tpu.pipeline_mode<synchronous>, transform_indices = @transform_13, window_bounds = array<i64: 1, 52>}, {transform_indices = @transform_14, window_bounds = array<i64: 16, 52>}]} {
    %c0 = arith.constant 0 : index
    %c0_0 = arith.constant 0 : index
    %0 = vector.load %arg1[%c0, %c0_0] : memref<16x128xf32, #tpu.memory_space<vmem>>, vector<16x128xf32>
    %c0_1 = arith.constant 0 : index
    %c0_2 = arith.constant 0 : index
    %1 = vector.load %arg3[%c0_1, %c0_2] : memref<128x128xf32, #tpu.memory_space<vmem>>, vector<128x128xf32>
    %cst = arith.constant dense<0.000000e+00> : vector<16x128xf32>
    %2 = tpu.matmul %0, %1, %cst {dimension_numbers = #tpu.dot_dimension_numbers<[1], [0], [0], [1], [0, 0, 1, 1], [], []>} : vector<16x128xf32>, vector<128x128xf32>, vector<16x128xf32> -> vector<16x128xf32>
    %c0_3 = arith.constant 0 : index
    %c0_4 = arith.constant 0 : index
    %3 = vector.load %arg4[%c0_3, %c0_4] : memref<1x128xf32, #tpu.memory_space<vmem>>, vector<1x128xf32>
    %4 = vector.broadcast %3 : vector<1x128xf32> to vector<16x128xf32>
    %5 = arith.addf %2, %4 : vector<16x128xf32>
    %c0_5 = arith.constant 0 : index
    %c0_6 = arith.constant 0 : index
    %6 = vector.load %arg5[%c0_5, %c0_6] : memref<1x128xf32, #tpu.memory_space<vmem>>, vector<1x128xf32>
    %c0_7 = arith.constant 0 : index
    %c0_8 = arith.constant 0 : index
    %7 = vector.load %arg6[%c0_7, %c0_8] : memref<1x128xf32, #tpu.memory_space<vmem>>, vector<1x128xf32>
    %cst_9 = arith.constant dense<0.000000e+00> : vector<16xf32>
    %8 = vector.multi_reduction <add>, %5, %cst_9 [1] : vector<16x128xf32> to vector<16xf32>
    %9 = vector.shape_cast %8 : vector<16xf32> to vector<16x1xf32>
    %cst_10 = arith.constant 1.280000e+02 : f32
    %10 = vector.broadcast %cst_10 : f32 to vector<16x1xf32>
    %11 = arith.divf %9, %10 : vector<16x1xf32>
    %12 = arith.mulf %5, %5 : vector<16x128xf32>
    %cst_11 = arith.constant dense<0.000000e+00> : vector<16xf32>
    %13 = vector.multi_reduction <add>, %12, %cst_11 [1] : vector<16x128xf32> to vector<16xf32>
    %14 = vector.shape_cast %13 : vector<16xf32> to vector<16x1xf32>
    %cst_12 = arith.constant 1.280000e+02 : f32
    %15 = vector.broadcast %cst_12 : f32 to vector<16x1xf32>
    %16 = arith.divf %14, %15 : vector<16x1xf32>
    %17 = arith.mulf %11, %11 : vector<16x1xf32>
    %18 = arith.subf %16, %17 : vector<16x1xf32>
    %19 = vector.broadcast %11 : vector<16x1xf32> to vector<16x128xf32>
    %20 = arith.subf %5, %19 : vector<16x128xf32>
    %cst_13 = arith.constant 9.99999974E-6 : f32
    %21 = vector.broadcast %cst_13 : f32 to vector<16x1xf32>
    %22 = arith.addf %18, %21 : vector<16x1xf32>
    %23 = math.rsqrt %22 : vector<16x1xf32>
    %24 = vector.broadcast %23 : vector<16x1xf32> to vector<16x128xf32>
    %25 = arith.mulf %20, %24 : vector<16x128xf32>
    %26 = vector.broadcast %6 : vector<1x128xf32> to vector<16x128xf32>
    %27 = arith.mulf %25, %26 : vector<16x128xf32>
    %28 = vector.broadcast %7 : vector<1x128xf32> to vector<16x128xf32>
    %29 = arith.addf %27, %28 : vector<16x128xf32>
    %30 = arith.negf %29 : vector<16x128xf32>
    %31 = math.exp %30 : vector<16x128xf32>
    %cst_14 = arith.constant 1.000000e+00 : f32
    %32 = vector.broadcast %cst_14 : f32 to vector<16x128xf32>
    %33 = arith.addf %32, %31 : vector<16x128xf32>
    %34 = arith.divf %32, %33 : vector<16x128xf32>
    %35 = arith.mulf %29, %34 : vector<16x128xf32>
    %c0_15 = arith.constant 0 : index
    %c0_16 = arith.constant 0 : index
    %36 = vector.load %arg7[%c0_15, %c0_16] : memref<128x128xf32, #tpu.memory_space<vmem>>, vector<128x128xf32>
    %cst_17 = arith.constant dense<0.000000e+00> : vector<16x128xf32>
    %37 = tpu.matmul %35, %36, %cst_17 {dimension_numbers = #tpu.dot_dimension_numbers<[1], [0], [0], [1], [0, 0, 1, 1], [], []>} : vector<16x128xf32>, vector<128x128xf32>, vector<16x128xf32> -> vector<16x128xf32>
    %c0_18 = arith.constant 0 : index
    %c0_19 = arith.constant 0 : index
    %38 = vector.load %arg8[%c0_18, %c0_19] : memref<1x128xf32, #tpu.memory_space<vmem>>, vector<1x128xf32>
    %39 = vector.broadcast %38 : vector<1x128xf32> to vector<16x128xf32>
    %40 = arith.addf %37, %39 : vector<16x128xf32>
    %c0_20 = arith.constant 0 : index
    %c0_21 = arith.constant 0 : index
    %41 = vector.load %arg9[%c0_20, %c0_21] : memref<1x128xf32, #tpu.memory_space<vmem>>, vector<1x128xf32>
    %c0_22 = arith.constant 0 : index
    %c0_23 = arith.constant 0 : index
    %42 = vector.load %arg10[%c0_22, %c0_23] : memref<1x128xf32, #tpu.memory_space<vmem>>, vector<1x128xf32>
    %cst_24 = arith.constant dense<0.000000e+00> : vector<16xf32>
    %43 = vector.multi_reduction <add>, %40, %cst_24 [1] : vector<16x128xf32> to vector<16xf32>
    %44 = vector.shape_cast %43 : vector<16xf32> to vector<16x1xf32>
    %cst_25 = arith.constant 1.280000e+02 : f32
    %45 = vector.broadcast %cst_25 : f32 to vector<16x1xf32>
    %46 = arith.divf %44, %45 : vector<16x1xf32>
    %47 = arith.mulf %40, %40 : vector<16x128xf32>
    %cst_26 = arith.constant dense<0.000000e+00> : vector<16xf32>
    %48 = vector.multi_reduction <add>, %47, %cst_26 [1] : vector<16x128xf32> to vector<16xf32>
    %49 = vector.shape_cast %48 : vector<16xf32> to vector<16x1xf32>
    %cst_27 = arith.constant 1.280000e+02 : f32
    %50 = vector.broadcast %cst_27 : f32 to vector<16x1xf32>
    %51 = arith.divf %49, %50 : vector<16x1xf32>
    %52 = arith.mulf %46, %46 : vector<16x1xf32>
    %53 = arith.subf %51, %52 : vector<16x1xf32>
    %54 = vector.broadcast %46 : vector<16x1xf32> to vector<16x128xf32>
    %55 = arith.subf %40, %54 : vector<16x128xf32>
    %cst_28 = arith.constant 9.99999974E-6 : f32
    %56 = vector.broadcast %cst_28 : f32 to vector<16x1xf32>
    %57 = arith.addf %53, %56 : vector<16x1xf32>
    %58 = math.rsqrt %57 : vector<16x1xf32>
    %59 = vector.broadcast %58 : vector<16x1xf32> to vector<16x128xf32>
    %60 = arith.mulf %55, %59 : vector<16x128xf32>
    %61 = vector.broadcast %41 : vector<1x128xf32> to vector<16x128xf32>
    %62 = arith.mulf %60, %61 : vector<16x128xf32>
    %63 = vector.broadcast %42 : vector<1x128xf32> to vector<16x128xf32>
    %64 = arith.addf %62, %63 : vector<16x128xf32>
    %65 = arith.negf %64 : vector<16x128xf32>
    %66 = math.exp %65 : vector<16x128xf32>
    %cst_29 = arith.constant 1.000000e+00 : f32
    %67 = vector.broadcast %cst_29 : f32 to vector<16x128xf32>
    %68 = arith.addf %67, %66 : vector<16x128xf32>
    %69 = arith.divf %67, %68 : vector<16x128xf32>
    %70 = arith.mulf %64, %69 : vector<16x128xf32>
    %c0_30 = arith.constant 0 : index
    %c0_31 = arith.constant 0 : index
    %71 = vector.load %arg11[%c0_30, %c0_31] : memref<128x52xf32, #tpu.memory_space<vmem>>, vector<128x52xf32>
    %cst_32 = arith.constant dense<0.000000e+00> : vector<16x52xf32>
    %72 = tpu.matmul %70, %71, %cst_32 {dimension_numbers = #tpu.dot_dimension_numbers<[1], [0], [0], [1], [0, 0, 1, 1], [], []>} : vector<16x128xf32>, vector<128x52xf32>, vector<16x52xf32> -> vector<16x52xf32>
    %c0_33 = arith.constant 0 : index
    %c0_34 = arith.constant 0 : index
    %73 = vector.load %arg12[%c0_33, %c0_34] : memref<1x52xf32, #tpu.memory_space<vmem>>, vector<1x52xf32>
    %74 = vector.broadcast %73 : vector<1x52xf32> to vector<16x52xf32>
    %75 = arith.addf %72, %74 : vector<16x52xf32>
    %c0_35 = arith.constant 0 : index
    %c0_36 = arith.constant 0 : index
    %76 = vector.load %arg2[%c0_35, %c0_36] : memref<16x384xf32, #tpu.memory_space<vmem>>, vector<16x384xf32>
    %c0_37 = arith.constant 0 : index
    %c0_38 = arith.constant 0 : index
    %77 = vector.load %arg13[%c0_37, %c0_38] : memref<384x52xf32, #tpu.memory_space<vmem>>, vector<384x52xf32>
    %cst_39 = arith.constant dense<0.000000e+00> : vector<16x52xf32>
    %78 = tpu.matmul %76, %77, %cst_39 {dimension_numbers = #tpu.dot_dimension_numbers<[1], [0], [0], [1], [0, 0, 1, 1], [], []>} : vector<16x384xf32>, vector<384x52xf32>, vector<16x52xf32> -> vector<16x52xf32>
    %c0_40 = arith.constant 0 : index
    %c0_41 = arith.constant 0 : index
    %79 = vector.load %arg14[%c0_40, %c0_41] : memref<1x52xf32, #tpu.memory_space<vmem>>, vector<1x52xf32>
    %80 = vector.broadcast %79 : vector<1x52xf32> to vector<16x52xf32>
    %81 = arith.addf %78, %80 : vector<16x52xf32>
    %82 = arith.mulf %75, %81 : vector<16x52xf32>
    %c0_42 = arith.constant 0 : index
    %c0_43 = arith.constant 0 : index
    %83 = vector.load %arg15[%c0_42, %c0_43] : memref<16x52xf32, #tpu.memory_space<vmem>>, vector<16x52xf32>
    tpu.vector_store %arg15[%c0_42, %c0_43], %82 {strides = array<i32>} : memref<16x52xf32, #tpu.memory_space<vmem>>, vector<16x52xf32>,
    return
  }
  func.func @transform_0(%arg0: i32) -> (i32, i32) {
    %c0_i32 = arith.constant 0 : i32
    %c0_i32_0 = arith.constant 0 : i32
    return %arg0, %c0_i32 : i32, i32
  }
  func.func @transform_1(%arg0: i32) -> (i32, i32) {
    %c0_i32 = arith.constant 0 : i32
    %c0_i32_0 = arith.constant 0 : i32
    return %arg0, %c0_i32 : i32, i32
  }
  func.func @transform_2(%arg0: i32) -> (i32, i32) {
    %c0_i32 = arith.constant 0 : i32
    %c0_i32_0 = arith.constant 0 : i32
    %c0_i32_1 = arith.constant 0 : i32
    return %c0_i32, %c0_i32_0 : i32, i32
  }
  func.func @transform_3(%arg0: i32) -> (i32, i32) {
    %c0_i32 = arith.constant 0 : i32
    %c0_i32_0 = arith.constant 0 : i32
    %c0_i32_1 = arith.constant 0 : i32
    return %c0_i32, %c0_i32_0 : i32, i32
  }
  func.func @transform_4(%arg0: i32) -> (i32, i32) {
    %c0_i32 = arith.constant 0 : i32
    %c0_i32_0 = arith.constant 0 : i32
    %c0_i32_1 = arith.constant 0 : i32
    return %c0_i32, %c0_i32_0 : i32, i32
  }
  func.func @transform_5(%arg0: i32) -> (i32, i32) {
    %c0_i32 = arith.constant 0 : i32
    %c0_i32_0 = arith.constant 0 : i32
    %c0_i32_1 = arith.constant 0 : i32
    return %c0_i32, %c0_i32_0 : i32, i32
  }
  func.func @transform_6(%arg0: i32) -> (i32, i32) {
    %c0_i32 = arith.constant 0 : i32
    %c0_i32_0 = arith.constant 0 : i32
    %c0_i32_1 = arith.constant 0 : i32
    return %c0_i32, %c0_i32_0 : i32, i32
  }
  func.func @transform_7(%arg0: i32) -> (i32, i32) {
    %c0_i32 = arith.constant 0 : i32
    %c0_i32_0 = arith.constant 0 : i32
    %c0_i32_1 = arith.constant 0 : i32
    return %c0_i32, %c0_i32_0 : i32, i32
  }
  func.func @transform_8(%arg0: i32) -> (i32, i32) {
    %c0_i32 = arith.constant 0 : i32
    %c0_i32_0 = arith.constant 0 : i32
    %c0_i32_1 = arith.constant 0 : i32
    return %c0_i32, %c0_i32_0 : i32, i32
  }
  func.func @transform_9(%arg0: i32) -> (i32, i32) {
    %c0_i32 = arith.constant 0 : i32
    %c0_i32_0 = arith.constant 0 : i32
    %c0_i32_1 = arith.constant 0 : i32
    return %c0_i32, %c0_i32_0 : i32, i32
  }
  func.func @transform_10(%arg0: i32) -> (i32, i32) {
    %c0_i32 = arith.constant 0 : i32
    %c0_i32_0 = arith.constant 0 : i32
    %c0_i32_1 = arith.constant 0 : i32
    return %c0_i32, %c0_i32_0 : i32, i32
  }
  func.func @transform_11(%arg0: i32) -> (i32, i32) {
    %c0_i32 = arith.constant 0 : i32
    %c0_i32_0 = arith.constant 0 : i32
    %c0_i32_1 = arith.constant 0 : i32
    return %c0_i32, %c0_i32_0 : i32, i32
  }
  func.func @transform_12(%arg0: i32) -> (i32, i32) {
    %c0_i32 = arith.constant 0 : i32
    %c0_i32_0 = arith.constant 0 : i32
    %c0_i32_1 = arith.constant 0 : i32
    return %c0_i32, %c0_i32_0 : i32, i32
  }
  func.func @transform_13(%arg0: i32) -> (i32, i32) {
    %c0_i32 = arith.constant 0 : i32
    %c0_i32_0 = arith.constant 0 : i32
    %c0_i32_1 = arith.constant 0 : i32
    return %c0_i32, %c0_i32_0 : i32, i32
  }
  func.func @transform_14(%arg0: i32) -> (i32, i32) {
    %c0_i32 = arith.constant 0 : i32
    %c0_i32_0 = arith.constant 0 : i32
    return %arg0, %c0_i32 : i32, i32
  }
}

</mosaic_0001>

<llo_original>
// kernel: tpu_custom_call.1
$region0: #{tpu_custom_call.1}
  #allocation0 [shape = 'u32[]', space=smem, size = 0x4, offset = 0x4, fixed_abs, tag = 'smem constant byte address 0x4 - core index']
  #allocation1 [shape = 'u32[144,128]{1,0:T(1,128)}', space=vmem, size = 0x12000, scoped, tag = 'internal scratch']
  %s0 = inlined_call_operand.vmem [shape: f32[16,128], index: 0, kind: input, shape index: {}]
  %s1 = inlined_call_operand.vmem [shape: f32[16,384], index: 1, kind: input, shape index: {}]
  %s2 = inlined_call_operand.vmem [shape: f32[128,128], index: 2, kind: input, shape index: {}]
  %s3 = inlined_call_operand.vmem [shape: f32[1,128], index: 3, kind: input, shape index: {}]
  %s4 = inlined_call_operand.vmem [shape: f32[1,128], index: 4, kind: input, shape index: {}]
  %s5 = inlined_call_operand.vmem [shape: f32[1,128], index: 5, kind: input, shape index: {}]
  %s6 = inlined_call_operand.vmem [shape: f32[128,128], index: 6, kind: input, shape index: {}]
  %s7 = inlined_call_operand.vmem [shape: f32[1,128], index: 7, kind: input, shape index: {}]
  %s8 = inlined_call_operand.vmem [shape: f32[1,128], index: 8, kind: input, shape index: {}]
  %s9 = inlined_call_operand.vmem [shape: f32[1,128], index: 9, kind: input, shape index: {}]
  %s10 = inlined_call_operand.vmem [shape: f32[128,52], index: 10, kind: input, shape index: {}]
  %s11 = inlined_call_operand.vmem [shape: f32[1,52], index: 11, kind: input, shape index: {}]
  %s12 = inlined_call_operand.vmem [shape: f32[384,52], index: 12, kind: input, shape index: {}]
  %s13 = inlined_call_operand.vmem [shape: f32[1,52], index: 13, kind: input, shape index: {}]
  %s14 = inlined_call_operand.hbm [shape: f32[16,52], index: 14, kind: output, shape index: {}]
  %s15 = sld [smem:[#allocation0]]
  $region66: #{tpu_custom_call.1} parent=0
    _
  %s17 = ssub.s32 1, %s15
  %s18 = scalar_select 0, %s17, %s15
  $region1: #{tpu_custom_call.1} parent=0
    #allocation2 [shape = 'u8[8192]{0}', space=vmem, size = 0x2000, scoped, tag = 'output window, operand 0, single buffered']
    #allocation3 [shape = 's32[1]{0}', space=sflag, size = 0x4, scoped, tag = 'scoped memory for tpu_custom_call.1']
    %19 = vsyncpa [#allocation3], 0
    // Predicated region
    $region2: #{tpu_custom_call.1} parent=1 // pred_check
      _
    $region3: #{tpu_custom_call.1} parent=1 // pred_check_branch
      %21 = sbr.rel (0) target = $region5
    $region4: #{tpu_custom_call.1} parent=1 // pred_region
      _
    $region5: #{tpu_custom_call.1} parent=1 // pred_fallthru
      _
    // Predicated region
    $region6: #{tpu_custom_call.1} parent=1 // pred_check
      _
    $region7: #{tpu_custom_call.1} parent=1 // pred_check_branch
      %23 = sbr.rel (0) target = $region9
    $region8: #{tpu_custom_call.1} parent=1 // pred_region
      _
    $region9: #{tpu_custom_call.1} parent=1 // pred_fallthru
      _
    // Predicated region
    $region10: #{tpu_custom_call.1} parent=1 // pred_check
      _
    $region11: #{tpu_custom_call.1} parent=1 // pred_check_branch
      %25 = sbr.rel (0) target = $region13
    $region12: #{tpu_custom_call.1} parent=1 // pred_region
      _
    $region13: #{tpu_custom_call.1} parent=1 // pred_fallthru
      _
    // Predicated region
    $region14: #{tpu_custom_call.1} parent=1 // pred_check
      _
    $region15: #{tpu_custom_call.1} parent=1 // pred_check_branch
      %27 = sbr.rel (0) target = $region17
    $region16: #{tpu_custom_call.1} parent=1 // pred_region
      _
    $region17: #{tpu_custom_call.1} parent=1 // pred_fallthru
      _
    // Predicated region
    $region18: #{tpu_custom_call.1} parent=1 // pred_check
      _
    $region19: #{tpu_custom_call.1} parent=1 // pred_check_branch
      %29 = sbr.rel (0) target = $region21
    $region20: #{tpu_custom_call.1} parent=1 // pred_region
      _
    $region21: #{tpu_custom_call.1} parent=1 // pred_fallthru
      _
    // Predicated region
    $region22: #{tpu_custom_call.1} parent=1 // pred_check
      _
    $region23: #{tpu_custom_call.1} parent=1 // pred_check_branch
      %31 = sbr.rel (0) target = $region25
    $region24: #{tpu_custom_call.1} parent=1 // pred_region
      _
    $region25: #{tpu_custom_call.1} parent=1 // pred_fallthru
      _
    // Predicated region
    $region26: #{tpu_custom_call.1} parent=1 // pred_check
      _
    $region27: #{tpu_custom_call.1} parent=1 // pred_check_branch
      %33 = sbr.rel (0) target = $region29
    $region28: #{tpu_custom_call.1} parent=1 // pred_region
      _
    $region29: #{tpu_custom_call.1} parent=1 // pred_fallthru
      _
    // Predicated region
    $region30: #{tpu_custom_call.1} parent=1 // pred_check
      _
    $region31: #{tpu_custom_call.1} parent=1 // pred_check_branch
      %35 = sbr.rel (0) target = $region33
    $region32: #{tpu_custom_call.1} parent=1 // pred_region
      _
    $region33: #{tpu_custom_call.1} parent=1 // pred_fallthru
      _
    // Predicated region
    $region34: #{tpu_custom_call.1} parent=1 // pred_check
      _
    $region35: #{tpu_custom_call.1} parent=1 // pred_check_branch
      %37 = sbr.rel (0) target = $region37
    $region36: #{tpu_custom_call.1} parent=1 // pred_region
      _
    $region37: #{tpu_custom_call.1} parent=1 // pred_fallthru
      _
    // Predicated region
    $region38: #{tpu_custom_call.1} parent=1 // pred_check
      _
    $region39: #{tpu_custom_call.1} parent=1 // pred_check_branch
      %39 = sbr.rel (0) target = $region41
    $region40: #{tpu_custom_call.1} parent=1 // pred_region
      _
    $region41: #{tpu_custom_call.1} parent=1 // pred_fallthru
      _
    // Predicated region
    $region42: #{tpu_custom_call.1} parent=1 // pred_check
      _
    $region43: #{tpu_custom_call.1} parent=1 // pred_check_branch
      %41 = sbr.rel (0) target = $region45
    $region44: #{tpu_custom_call.1} parent=1 // pred_region
      _
    $region45: #{tpu_custom_call.1} parent=1 // pred_fallthru
      _
    // Predicated region
    $region46: #{tpu_custom_call.1} parent=1 // pred_check
      _
    $region47: #{tpu_custom_call.1} parent=1 // pred_check_branch
      %43 = sbr.rel (0) target = $region49
    $region48: #{tpu_custom_call.1} parent=1 // pred_region
      _
    $region49: #{tpu_custom_call.1} parent=1 // pred_fallthru
      _
    // Predicated region
    $region50: #{tpu_custom_call.1} parent=1 // pred_check
      _
    $region51: #{tpu_custom_call.1} parent=1 // pred_check_branch
      %45 = sbr.rel (0) target = $region53
    $region52: #{tpu_custom_call.1} parent=1 // pred_region
      _
    $region53: #{tpu_custom_call.1} parent=1 // pred_fallthru
      _
    // Predicated region
    $region54: #{tpu_custom_call.1} parent=1 // pred_check
      _
    $region55: #{tpu_custom_call.1} parent=1 // pred_check_branch
      %47 = sbr.rel (0) target = $region57
    $region56: #{tpu_custom_call.1} parent=1 // pred_region
      _
    $region57: #{tpu_custom_call.1} parent=1 // pred_fallthru
      _
    %v48 = vld [vmem:[%s0] sm:$0xff]
    %v49 = vld [vmem:[%s0 + $0x8] sm:$0xff]
    %v50 = vld [vmem:[%s2] sm:$0xff]
    %v51 = vld [vmem:[%s2 + $0x8] sm:$0xff]
    %v52 = vld [vmem:[%s2 + $0x10] sm:$0xff]
    %v53 = vld [vmem:[%s2 + $0x18] sm:$0xff]
    %v54 = vld [vmem:[%s2 + $0x20] sm:$0xff]
    %v55 = vld [vmem:[%s2 + $0x28] sm:$0xff]
    %v56 = vld [vmem:[%s2 + $0x30] sm:$0xff]
    %v57 = vld [vmem:[%s2 + $0x38] sm:$0xff]
    %v58 = vld [vmem:[%s2 + $0x40] sm:$0xff]
    %v59 = vld [vmem:[%s2 + $0x48] sm:$0xff]
    %v60 = vld [vmem:[%s2 + $0x50] sm:$0xff]
    %v61 = vld [vmem:[%s2 + $0x58] sm:$0xff]
    %v62 = vld [vmem:[%s2 + $0x60] sm:$0xff]
    %v63 = vld [vmem:[%s2 + $0x68] sm:$0xff]
    %v64 = vld [vmem:[%s2 + $0x70] sm:$0xff]
    %v65 = vld [vmem:[%s2 + $0x78] sm:$0xff]
    %v66 = vld [vmem:[%s3] sm:$0x1]
    %v68 = vlaneseq
    %v69 = vshrl.u32 %v68, 7
    %v70 = vsub.s32 0, %v69
    %v71 = vrot.slane %v66, %v70
    %73 = vmatprep.subr.mxu0 0.0
    %74 = vmatpush1.msra.mxu0 %v50
    %75 = vmatprep.subr.mxu0 0.0
    %76 = vmatpush1.msra.mxu0 %v51
    %77 = vmatprep.subr.mxu0 0.0
    %78 = vmatpush1.msra.mxu0 %v52
    %79 = vmatprep.subr.mxu0 0.0
    %80 = vmatpush1.msra.mxu0 %v53
    %81 = vmatprep.subr.mxu0 0.0
    %82 = vmatpush1.msra.mxu0 %v54
    %83 = vmatprep.subr.mxu0 0.0
    %84 = vmatpush1.msra.mxu0 %v55
    %85 = vmatprep.subr.mxu0 0.0
    %86 = vmatpush1.msra.mxu0 %v56
    %87 = vmatprep.subr.mxu0 0.0
    %88 = vmatpush1.msra.mxu0 %v57
    %89 = vmatprep.subr.mxu0 0.0
    %90 = vmatpush1.msra.mxu0 %v58
    %91 = vmatprep.subr.mxu0 0.0
    %92 = vmatpush1.msra.mxu0 %v59
    %93 = vmatprep.subr.mxu0 0.0
    %94 = vmatpush1.msra.mxu0 %v60
    %95 = vmatprep.subr.mxu0 0.0
    %96 = vmatpush1.msra.mxu0 %v61
    %97 = vmatprep.subr.mxu0 0.0
    %98 = vmatpush1.msra.mxu0 %v62
    %99 = vmatprep.subr.mxu0 0.0
    %100 = vmatpush1.msra.mxu0 %v63
    %101 = vmatprep.subr.mxu0 0.0
    %102 = vmatpush1.msra.mxu0 %v64
    %103 = vmatprep.subr.mxu0 0.0
    %104 = vmatpush1.msra.mxu0 %v65
    %105 = vmatprep.subr.mxu0 0.0
    %106 = vmatpush1.msra.mxu0 0.0
    %107 = vmatprep.subr.mxu0 0.0
    %108 = vmatpush1.msra.mxu0 0.0
    %109 = vmatprep.subr.mxu0 0.0
    %110 = vmatpush1.msra.mxu0 0.0
    %111 = vmatprep.subr.mxu0 0.0
    %112 = vmatpush1.msra.mxu0 0.0
    %113 = vmatprep.subr.mxu0 0.0
    %114 = vmatpush1.msra.mxu0 0.0
    %115 = vmatprep.subr.mxu0 0.0
    %116 = vmatpush1.msra.mxu0 0.0
    %117 = vmatprep.subr.mxu0 0.0
    %118 = vmatpush1.msra.mxu0 0.0
    %119 = vmatprep.subr.mxu0 0.0
    %120 = vmatpush1.msra.mxu0 0.0
    %121 = vmatprep.subr.mxu0 0.0
    %122 = vmatpush1.msra.mxu0 0.0
    %123 = vmatprep.subr.mxu0 0.0
    %124 = vmatpush1.msra.mxu0 0.0
    %125 = vmatprep.subr.mxu0 0.0
    %126 = vmatpush1.msra.mxu0 0.0
    %127 = vmatprep.subr.mxu0 0.0
    %128 = vmatpush1.msra.mxu0 0.0
    %129 = vmatprep.subr.mxu0 0.0
    %130 = vmatpush1.msra.mxu0 0.0
    %131 = vmatprep.subr.mxu0 0.0
    %132 = vmatpush1.msra.mxu0 0.0
    %133 = vmatprep.subr.mxu0 0.0
    %134 = vmatpush1.msra.mxu0 0.0
    %135 = vmatprep.subr.mxu0 0.0
    %136 = vmatpush1.msra.mxu0 0.0
    %137 = vmatprep.mubr.f32.mxu0 0.0
    %138 = vmatmul.mubr.f32.gmra.mrb[0].mxu0 %v48
    %v139 = vpop.f32.mrb[0].mxu0
    %v140 = vadd.f32 %v71, %v139
    %v141 = vpop.f32.mrb[0].mxu0
    %142 = vmatprep.mubr.f32.mxu0 0.0
    %143 = vmatmul.mubr.f32.gmra.mrb[0].mxu0 %v49
    %v144 = vpop.f32.mrb[0].mxu0
    %v145 = vadd.f32 %v71, %v144
    %v146 = vpop.f32.mrb[0].mxu0
    %147 = vdwg.mxu0
    %v148 = vld [vmem:[%s4] sm:$0x1]
    %v149 = vld [vmem:[%s5] sm:$0x1]
    %150 = vadd.xlane.f32.xlu0 %v140
    %v151 = vpop.xlane.xlu0 %150
    %152 = vadd.xlane.f32.xlu0 %v145
    %v153 = vpop.xlane.xlu0 %152
    %v154 = vrcp.pop 128.0
    %v155 = vmul.f32 %v151, %v154
    %v156 = vmul.f32 %v153, %v154
    %v157 = vmul.f32 %v140, %v140
    %v158 = vmul.f32 %v145, %v145
    %159 = vadd.xlane.f32.xlu0 %v157
    %v160 = vpop.xlane.xlu0 %159
    %161 = vadd.xlane.f32.xlu0 %v158
    %v162 = vpop.xlane.xlu0 %161
    %v163 = vmul.f32 %v160, %v154
    %v164 = vmul.f32 %v162, %v154
    %v165 = vmul.f32 %v155, %v155
    %v166 = vmul.f32 %v156, %v156
    %v167 = vsub.f32 %v163, %v165
    %v168 = vsub.f32 %v164, %v166
    %v169 = vsub.f32 %v140, %v155
    %v170 = vsub.f32 %v145, %v156
    %v171 = vadd.f32 %v167, 1e-05
    %v172 = vadd.f32 %v168, 1e-05
    %v173 = vrsqrt.pop %v171
    %v174 = vrsqrt.pop %v172
    %v175 = vmul.f32 %v169, %v173
    %v176 = vmul.f32 %v170, %v174
    %v178 = vlaneseq
    %v179 = vshrl.u32 %v178, 7
    %v180 = vsub.s32 0, %v179
    %v181 = vrot.slane %v148, %v180
    %v183 = vmul.f32 %v175, %v181
    %v184 = vmul.f32 %v176, %v181
    %v186 = vlaneseq
    %v187 = vshrl.u32 %v186, 7
    %v188 = vsub.s32 0, %v187
    %v189 = vrot.slane %v149, %v188
    %v191 = vadd.f32 %v183, %v189
    %v192 = vadd.f32 %v184, %v189
    %v193 = vxor.u32 %v191, 2147483648
    %v194 = vxor.u32 %v192, 2147483648
    %v195 = vmul.f32 %v193, 1.442695
    %v196 = vpow.pop %v195
    %v197 = vmul.f32 %v194, 1.442695
    %v198 = vpow.pop %v197
    %v199 = vadd.f32 %v196, 1.0
    %v200 = vadd.f32 %v198, 1.0
    %v201 = vrcp.pop %v199
    %v202 = vmul.f32 1.0, %v201
    %v203 = vrcp.pop %v200
    %v204 = vmul.f32 1.0, %v203
    %v205 = vmul.f32 %v191, %v202
    %v206 = vmul.f32 %v192, %v204
    %v207 = vld [vmem:[%s6] sm:$0xff]
    %v208 = vld [vmem:[%s6 + $0x8] sm:$0xff]
    %v209 = vld [vmem:[%s6 + $0x10] sm:$0xff]
    %v210 = vld [vmem:[%s6 + $0x18] sm:$0xff]
    %v211 = vld [vmem:[%s6 + $0x20] sm:$0xff]
    %v212 = vld [vmem:[%s6 + $0x28] sm:$0xff]
    %v213 = vld [vmem:[%s6 + $0x30] sm:$0xff]
    %v214 = vld [vmem:[%s6 + $0x38] sm:$0xff]
    %v215 = vld [vmem:[%s6 + $0x40] sm:$0xff]
    %v216 = vld [vmem:[%s6 + $0x48] sm:$0xff]
    %v217 = vld [vmem:[%s6 + $0x50] sm:$0xff]
    %v218 = vld [vmem:[%s6 + $0x58] sm:$0xff]
    %v219 = vld [vmem:[%s6 + $0x60] sm:$0xff]
    %v220 = vld [vmem:[%s6 + $0x68] sm:$0xff]
    %v221 = vld [vmem:[%s6 + $0x70] sm:$0xff]
    %v222 = vld [vmem:[%s6 + $0x78] sm:$0xff]
    %v223 = vld [vmem:[%s7] sm:$0x1]
    %v225 = vlaneseq
    %v226 = vshrl.u32 %v225, 7
    %v227 = vsub.s32 0, %v226
    %v228 = vrot.slane %v223, %v227
    %230 = vmatprep.subr.mxu0 0.0
    %231 = vmatpush1.msra.mxu0 %v207
    %232 = vmatprep.subr.mxu0 0.0
    %233 = vmatpush1.msra.mxu0 %v208
    %234 = vmatprep.subr.mxu0 0.0
    %235 = vmatpush1.msra.mxu0 %v209
    %236 = vmatprep.subr.mxu0 0.0
    %237 = vmatpush1.msra.mxu0 %v210
    %238 = vmatprep.subr.mxu0 0.0
    %239 = vmatpush1.msra.mxu0 %v211
    %240 = vmatprep.subr.mxu0 0.0
    %241 = vmatpush1.msra.mxu0 %v212
    %242 = vmatprep.subr.mxu0 0.0
    %243 = vmatpush1.msra.mxu0 %v213
    %244 = vmatprep.subr.mxu0 0.0
    %245 = vmatpush1.msra.mxu0 %v214
    %246 = vmatprep.subr.mxu0 0.0
    %247 = vmatpush1.msra.mxu0 %v215
    %248 = vmatprep.subr.mxu0 0.0
    %249 = vmatpush1.msra.mxu0 %v216
    %250 = vmatprep.subr.mxu0 0.0
    %251 = vmatpush1.msra.mxu0 %v217
    %252 = vmatprep.subr.mxu0 0.0
    %253 = vmatpush1.msra.mxu0 %v218
    %254 = vmatprep.subr.mxu0 0.0
    %255 = vmatpush1.msra.mxu0 %v219
    %256 = vmatprep.subr.mxu0 0.0
    %257 = vmatpush1.msra.mxu0 %v220
    %258 = vmatprep.subr.mxu0 0.0
    %259 = vmatpush1.msra.mxu0 %v221
    %260 = vmatprep.subr.mxu0 0.0
    %261 = vmatpush1.msra.mxu0 %v222
    %262 = vmatprep.subr.mxu0 0.0
    %263 = vmatpush1.msra.mxu0 0.0
    %264 = vmatprep.subr.mxu0 0.0
    %265 = vmatpush1.msra.mxu0 0.0
    %266 = vmatprep.subr.mxu0 0.0
    %267 = vmatpush1.msra.mxu0 0.0
    %268 = vmatprep.subr.mxu0 0.0
    %269 = vmatpush1.msra.mxu0 0.0
    %270 = vmatprep.subr.mxu0 0.0
    %271 = vmatpush1.msra.mxu0 0.0
    %272 = vmatprep.subr.mxu0 0.0
    %273 = vmatpush1.msra.mxu0 0.0
    %274 = vmatprep.subr.mxu0 0.0
    %275 = vmatpush1.msra.mxu0 0.0
    %276 = vmatprep.subr.mxu0 0.0
    %277 = vmatpush1.msra.mxu0 0.0
    %278 = vmatprep.subr.mxu0 0.0
    %279 = vmatpush1.msra.mxu0 0.0
    %280 = vmatprep.subr.mxu0 0.0
    %281 = vmatpush1.msra.mxu0 0.0
    %282 = vmatprep.subr.mxu0 0.0
    %283 = vmatpush1.msra.mxu0 0.0
    %284 = vmatprep.subr.mxu0 0.0
    %285 = vmatpush1.msra.mxu0 0.0
    %286 = vmatprep.subr.mxu0 0.0
    %287 = vmatpush1.msra.mxu0 0.0
    %288 = vmatprep.subr.mxu0 0.0
    %289 = vmatpush1.msra.mxu0 0.0
    %290 = vmatprep.subr.mxu0 0.0
    %291 = vmatpush1.msra.mxu0 0.0
    %292 = vmatprep.subr.mxu0 0.0
    %293 = vmatpush1.msra.mxu0 0.0
    %294 = vmatprep.mubr.f32.mxu0 0.0
    %295 = vmatmul.mubr.f32.gmra.mrb[0].mxu0 %v205
    %v296 = vpop.f32.mrb[0].mxu0
    %v297 = vadd.f32 %v228, %v296
    %v298 = vpop.f32.mrb[0].mxu0
    %299 = vmatprep.mubr.f32.mxu0 0.0
    %300 = vmatmul.mubr.f32.gmra.mrb[0].mxu0 %v206
    %v301 = vpop.f32.mrb[0].mxu0
    %v302 = vadd.f32 %v228, %v301
    %v303 = vpop.f32.mrb[0].mxu0
    %304 = vdwg.mxu0
    %v305 = vld [vmem:[%s8] sm:$0x1]
    %v306 = vld [vmem:[%s9] sm:$0x1]
    %307 = vadd.xlane.f32.xlu0 %v297
    %v308 = vpop.xlane.xlu0 %307
    %309 = vadd.xlane.f32.xlu0 %v302
    %v310 = vpop.xlane.xlu0 %309
    %v311 = vmul.f32 %v308, %v154
    %v312 = vmul.f32 %v310, %v154
    %v313 = vmul.f32 %v297, %v297
    %v314 = vmul.f32 %v302, %v302
    %315 = vadd.xlane.f32.xlu0 %v313
    %v316 = vpop.xlane.xlu0 %315
    %317 = vadd.xlane.f32.xlu0 %v314
    %v318 = vpop.xlane.xlu0 %317
    %v319 = vmul.f32 %v316, %v154
    %v320 = vmul.f32 %v318, %v154
    %v321 = vmul.f32 %v311, %v311
    %v322 = vmul.f32 %v312, %v312
    %v323 = vsub.f32 %v319, %v321
    %v324 = vsub.f32 %v320, %v322
    %v325 = vsub.f32 %v297, %v311
    %v326 = vsub.f32 %v302, %v312
    %v327 = vadd.f32 %v323, 1e-05
    %v328 = vadd.f32 %v324, 1e-05
    %v329 = vrsqrt.pop %v327
    %v330 = vrsqrt.pop %v328
    %v331 = vmul.f32 %v325, %v329
    %v332 = vmul.f32 %v326, %v330
    %v334 = vlaneseq
    %v335 = vshrl.u32 %v334, 7
    %v336 = vsub.s32 0, %v335
    %v337 = vrot.slane %v305, %v336
    %v339 = vmul.f32 %v331, %v337
    %v340 = vmul.f32 %v332, %v337
    %v342 = vlaneseq
    %v343 = vshrl.u32 %v342, 7
    %v344 = vsub.s32 0, %v343
    %v345 = vrot.slane %v306, %v344
    %v347 = vadd.f32 %v339, %v345
    %v348 = vadd.f32 %v340, %v345
    %v349 = vxor.u32 %v347, 2147483648
    %v350 = vxor.u32 %v348, 2147483648
    %v351 = vmul.f32 %v349, 1.442695
    %v352 = vpow.pop %v351
    %v353 = vmul.f32 %v350, 1.442695
    %v354 = vpow.pop %v353
    %v355 = vadd.f32 %v352, 1.0
    %v356 = vadd.f32 %v354, 1.0
    %v357 = vrcp.pop %v355
    %v358 = vmul.f32 1.0, %v357
    %v359 = vrcp.pop %v356
    %v360 = vmul.f32 1.0, %v359
    %v361 = vmul.f32 %v347, %v358
    %v362 = vmul.f32 %v348, %v360
    %v363 = vld [vmem:[%s10] sm:$0xff]
    %v364 = vld [vmem:[%s10 + $0x8] sm:$0xff]
    %v365 = vld [vmem:[%s10 + $0x10] sm:$0xff]
    %v366 = vld [vmem:[%s10 + $0x18] sm:$0xff]
    %v367 = vld [vmem:[%s10 + $0x20] sm:$0xff]
    %v368 = vld [vmem:[%s10 + $0x28] sm:$0xff]
    %v369 = vld [vmem:[%s10 + $0x30] sm:$0xff]
    %v370 = vld [vmem:[%s10 + $0x38] sm:$0xff]
    %v371 = vld [vmem:[%s10 + $0x40] sm:$0xff]
    %v372 = vld [vmem:[%s10 + $0x48] sm:$0xff]
    %v373 = vld [vmem:[%s10 + $0x50] sm:$0xff]
    %v374 = vld [vmem:[%s10 + $0x58] sm:$0xff]
    %v375 = vld [vmem:[%s10 + $0x60] sm:$0xff]
    %v376 = vld [vmem:[%s10 + $0x68] sm:$0xff]
    %v377 = vld [vmem:[%s10 + $0x70] sm:$0xff]
    %v378 = vld [vmem:[%s10 + $0x78] sm:$0xff]
    %v379 = vld [vmem:[%s11] sm:$0x1]
    %v381 = vlaneseq
    %v382 = vshrl.u32 %v381, 7
    %v383 = vsub.s32 0, %v382
    %v384 = vrot.slane %v379, %v383
    %386 = vmatprep.subr.mxu0 0.0
    %387 = vmatpush1.msra.mxu0 %v363
    %388 = vmatprep.subr.mxu0 0.0
    %389 = vmatpush1.msra.mxu0 %v364
    %390 = vmatprep.subr.mxu0 0.0
    %391 = vmatpush1.msra.mxu0 %v365
    %392 = vmatprep.subr.mxu0 0.0
    %393 = vmatpush1.msra.mxu0 %v366
    %394 = vmatprep.subr.mxu0 0.0
    %395 = vmatpush1.msra.mxu0 %v367
    %396 = vmatprep.subr.mxu0 0.0
    %397 = vmatpush1.msra.mxu0 %v368
    %398 = vmatprep.subr.mxu0 0.0
    %399 = vmatpush1.msra.mxu0 %v369
    %400 = vmatprep.subr.mxu0 0.0
    %401 = vmatpush1.msra.mxu0 %v370
    %402 = vmatprep.subr.mxu0 0.0
    %403 = vmatpush1.msra.mxu0 %v371
    %404 = vmatprep.subr.mxu0 0.0
    %405 = vmatpush1.msra.mxu0 %v372
    %406 = vmatprep.subr.mxu0 0.0
    %407 = vmatpush1.msra.mxu0 %v373
    %408 = vmatprep.subr.mxu0 0.0
    %409 = vmatpush1.msra.mxu0 %v374
    %410 = vmatprep.subr.mxu0 0.0
    %411 = vmatpush1.msra.mxu0 %v375
    %412 = vmatprep.subr.mxu0 0.0
    %413 = vmatpush1.msra.mxu0 %v376
    %414 = vmatprep.subr.mxu0 0.0
    %415 = vmatpush1.msra.mxu0 %v377
    %416 = vmatprep.subr.mxu0 0.0
    %417 = vmatpush1.msra.mxu0 %v378
    %418 = vmatprep.subr.mxu0 0.0
    %419 = vmatpush1.msra.mxu0 0.0
    %420 = vmatprep.subr.mxu0 0.0
    %421 = vmatpush1.msra.mxu0 0.0
    %422 = vmatprep.subr.mxu0 0.0
    %423 = vmatpush1.msra.mxu0 0.0
    %424 = vmatprep.subr.mxu0 0.0
    %425 = vmatpush1.msra.mxu0 0.0
    %426 = vmatprep.subr.mxu0 0.0
    %427 = vmatpush1.msra.mxu0 0.0
    %428 = vmatprep.subr.mxu0 0.0
    %429 = vmatpush1.msra.mxu0 0.0
    %430 = vmatprep.subr.mxu0 0.0
    %431 = vmatpush1.msra.mxu0 0.0
    %432 = vmatprep.subr.mxu0 0.0
    %433 = vmatpush1.msra.mxu0 0.0
    %434 = vmatprep.subr.mxu0 0.0
    %435 = vmatpush1.msra.mxu0 0.0
    %436 = vmatprep.subr.mxu0 0.0
    %437 = vmatpush1.msra.mxu0 0.0
    %438 = vmatprep.subr.mxu0 0.0
    %439 = vmatpush1.msra.mxu0 0.0
    %440 = vmatprep.subr.mxu0 0.0
    %441 = vmatpush1.msra.mxu0 0.0
    %442 = vmatprep.subr.mxu0 0.0
    %443 = vmatpush1.msra.mxu0 0.0
    %444 = vmatprep.subr.mxu0 0.0
    %445 = vmatpush1.msra.mxu0 0.0
    %446 = vmatprep.subr.mxu0 0.0
    %447 = vmatpush1.msra.mxu0 0.0
    %448 = vmatprep.subr.mxu0 0.0
    %449 = vmatpush1.msra.mxu0 0.0
    %450 = vmatprep.mubr.f32.mxu0 0.0
    %451 = vmatmul.mubr.f32.gmra.mrb[0].mxu0 %v361
    %v452 = vpop.f32.mrb[0].mxu0
    %v453 = vadd.f32 %v384, %v452
    %v454 = vpop.f32.mrb[0].mxu0
    %455 = vmatprep.mubr.f32.mxu0 0.0
    %456 = vmatmul.mubr.f32.gmra.mrb[0].mxu0 %v362
    %v457 = vpop.f32.mrb[0].mxu0
    %v458 = vadd.f32 %v384, %v457
    %v459 = vpop.f32.mrb[0].mxu0
    %460 = vdwg.mxu0
    %v461 = vld [vmem:[%s1] sm:$0xff]
    %v462 = vld [vmem:[%s1 + $0x8] sm:$0xff]
    %v463 = vld [vmem:[%s1 + $0x10] sm:$0xff]
    %v464 = vld [vmem:[%s1 + $0x18] sm:$0xff]
    %v465 = vld [vmem:[%s1 + $0x20] sm:$0xff]
    %v466 = vld [vmem:[%s1 + $0x28] sm:$0xff]
    %v467 = vld [vmem:[%s12] sm:$0xff]
    %v468 = vld [vmem:[%s12 + $0x8] sm:$0xff]
    %v469 = vld [vmem:[%s12 + $0x10] sm:$0xff]
    %v470 = vld [vmem:[%s12 + $0x18] sm:$0xff]
    %v471 = vld [vmem:[%s12 + $0x20] sm:$0xff]
    %v472 = vld [vmem:[%s12 + $0x28] sm:$0xff]
    %v473 = vld [vmem:[%s12 + $0x30] sm:$0xff]
    %v474 = vld [vmem:[%s12 + $0x38] sm:$0xff]
    %v475 = vld [vmem:[%s12 + $0x40] sm:$0xff]
    %v476 = vld [vmem:[%s12 + $0x48] sm:$0xff]
    %v477 = vld [vmem:[%s12 + $0x50] sm:$0xff]
    %v478 = vld [vmem:[%s12 + $0x58] sm:$0xff]
    %v479 = vld [vmem:[%s12 + $0x60] sm:$0xff]
    %v480 = vld [vmem:[%s12 + $0x68] sm:$0xff]
    %v481 = vld [vmem:[%s12 + $0x70] sm:$0xff]
    %v482 = vld [vmem:[%s12 + $0x78] sm:$0xff]
    %v483 = vld [vmem:[%s12 + $0x80] sm:$0xff]
    %v484 = vld [vmem:[%s12 + $0x88] sm:$0xff]
    %v485 = vld [vmem:[%s12 + $0x90] sm:$0xff]
    %v486 = vld [vmem:[%s12 + $0x98] sm:$0xff]
    %v487 = vld [vmem:[%s12 + $0xa0] sm:$0xff]
    %v488 = vld [vmem:[%s12 + $0xa8] sm:$0xff]
    %v489 = vld [vmem:[%s12 + $0xb0] sm:$0xff]
    %v490 = vld [vmem:[%s12 + $0xb8] sm:$0xff]
    %v491 = vld [vmem:[%s12 + $0xc0] sm:$0xff]
    %v492 = vld [vmem:[%s12 + $0xc8] sm:$0xff]
    %v493 = vld [vmem:[%s12 + $0xd0] sm:$0xff]
    %v494 = vld [vmem:[%s12 + $0xd8] sm:$0xff]
    %v495 = vld [vmem:[%s12 + $0xe0] sm:$0xff]
    %v496 = vld [vmem:[%s12 + $0xe8] sm:$0xff]
    %v497 = vld [vmem:[%s12 + $0xf0] sm:$0xff]
    %v498 = vld [vmem:[%s12 + $0xf8] sm:$0xff]
    %v499 = vld [vmem:[%s12 + $0x100] sm:$0xff]
    %v500 = vld [vmem:[%s12 + $0x108] sm:$0xff]
    %v501 = vld [vmem:[%s12 + $0x110] sm:$0xff]
    %v502 = vld [vmem:[%s12 + $0x118] sm:$0xff]
    %v503 = vld [vmem:[%s12 + $0x120] sm:$0xff]
    %v504 = vld [vmem:[%s12 + $0x128] sm:$0xff]
    %v505 = vld [vmem:[%s12 + $0x130] sm:$0xff]
    %v506 = vld [vmem:[%s12 + $0x138] sm:$0xff]
    %v507 = vld [vmem:[%s12 + $0x140] sm:$0xff]
    %v508 = vld [vmem:[%s12 + $0x148] sm:$0xff]
    %v509 = vld [vmem:[%s12 + $0x150] sm:$0xff]
    %v510 = vld [vmem:[%s12 + $0x158] sm:$0xff]
    %v511 = vld [vmem:[%s12 + $0x160] sm:$0xff]
    %v512 = vld [vmem:[%s12 + $0x168] sm:$0xff]
    %v513 = vld [vmem:[%s12 + $0x170] sm:$0xff]
    %v514 = vld [vmem:[%s12 + $0x178] sm:$0xff]
    %v515 = vld [vmem:[%s13] sm:$0x1]
    %v517 = vlaneseq
    %v518 = vshrl.u32 %v517, 7
    %v519 = vsub.s32 0, %v518
    %v520 = vrot.slane %v515, %v519
    %522 = vmatprep.subr.mxu0 0.0
    %523 = vmatpush1.msra.mxu0 %v467
    %524 = vmatprep.subr.mxu0 0.0
    %525 = vmatpush1.msra.mxu0 %v468
    %526 = vmatprep.subr.mxu0 0.0
    %527 = vmatpush1.msra.mxu0 %v469
    %528 = vmatprep.subr.mxu0 0.0
    %529 = vmatpush1.msra.mxu0 %v470
    %530 = vmatprep.subr.mxu0 0.0
    %531 = vmatpush1.msra.mxu0 %v471
    %532 = vmatprep.subr.mxu0 0.0
    %533 = vmatpush1.msra.mxu0 %v472
    %534 = vmatprep.subr.mxu0 0.0
    %535 = vmatpush1.msra.mxu0 %v473
    %536 = vmatprep.subr.mxu0 0.0
    %537 = vmatpush1.msra.mxu0 %v474
    %538 = vmatprep.subr.mxu0 0.0
    %539 = vmatpush1.msra.mxu0 %v475
    %540 = vmatprep.subr.mxu0 0.0
    %541 = vmatpush1.msra.mxu0 %v476
    %542 = vmatprep.subr.mxu0 0.0
    %543 = vmatpush1.msra.mxu0 %v477
    %544 = vmatprep.subr.mxu0 0.0
    %545 = vmatpush1.msra.mxu0 %v478
    %546 = vmatprep.subr.mxu0 0.0
    %547 = vmatpush1.msra.mxu0 %v479
    %548 = vmatprep.subr.mxu0 0.0
    %549 = vmatpush1.msra.mxu0 %v480
    %550 = vmatprep.subr.mxu0 0.0
    %551 = vmatpush1.msra.mxu0 %v481
    %552 = vmatprep.subr.mxu0 0.0
    %553 = vmatpush1.msra.mxu0 %v482
    %554 = vmatprep.subr.mxu0 0.0
    %555 = vmatpush1.msra.mxu0 %v483
    %556 = vmatprep.subr.mxu0 0.0
    %557 = vmatpush1.msra.mxu0 %v484
    %558 = vmatprep.subr.mxu0 0.0
    %559 = vmatpush1.msra.mxu0 %v485
    %560 = vmatprep.subr.mxu0 0.0
    %561 = vmatpush1.msra.mxu0 %v486
    %562 = vmatprep.subr.mxu0 0.0
    %563 = vmatpush1.msra.mxu0 %v487
    %564 = vmatprep.subr.mxu0 0.0
    %565 = vmatpush1.msra.mxu0 %v488
    %566 = vmatprep.subr.mxu0 0.0
    %567 = vmatpush1.msra.mxu0 %v489
    %568 = vmatprep.subr.mxu0 0.0
    %569 = vmatpush1.msra.mxu0 %v490
    %570 = vmatprep.subr.mxu0 0.0
    %571 = vmatpush1.msra.mxu0 %v491
    %572 = vmatprep.subr.mxu0 0.0
    %573 = vmatpush1.msra.mxu0 %v492
    %574 = vmatprep.subr.mxu0 0.0
    %575 = vmatpush1.msra.mxu0 %v493
    %576 = vmatprep.subr.mxu0 0.0
    %577 = vmatpush1.msra.mxu0 %v494
    %578 = vmatprep.subr.mxu0 0.0
    %579 = vmatpush1.msra.mxu0 %v495
    %580 = vmatprep.subr.mxu0 0.0
    %581 = vmatpush1.msra.mxu0 %v496
    %582 = vmatprep.subr.mxu0 0.0
    %583 = vmatpush1.msra.mxu0 %v497
    %584 = vmatprep.subr.mxu0 0.0
    %585 = vmatpush1.msra.mxu0 %v498
    %586 = vmatprep.mubr.f32.mxu0 %v462
    %587 = vmatmul.mubr.f32.gmra.mrb[0].mxu0 %v461
    %v588 = vpop.f32.mrb[0].mxu0
    %v589 = vadd.f32 %v520, %v588
    %v590 = vpop.f32.mrb[0].mxu0
    %591 = vmatprep.mubr.f32.mxu0 %v465
    %592 = vmatmul.mubr.f32.gmra.mrb[0].mxu0 %v464
    %v593 = vpop.f32.mrb[0].mxu0
    %v594 = vadd.f32 %v520, %v593
    %v595 = vpop.f32.mrb[0].mxu0
    %596 = vdwg.mxu0
    %597 = vmatprep.subr.mxu0 0.0
    %598 = vmatpush1.msra.mxu0 %v499
    %599 = vmatprep.subr.mxu0 0.0
    %600 = vmatpush1.msra.mxu0 %v500
    %601 = vmatprep.subr.mxu0 0.0
    %602 = vmatpush1.msra.mxu0 %v501
    %603 = vmatprep.subr.mxu0 0.0
    %604 = vmatpush1.msra.mxu0 %v502
    %605 = vmatprep.subr.mxu0 0.0
    %606 = vmatpush1.msra.mxu0 %v503
    %607 = vmatprep.subr.mxu0 0.0
    %608 = vmatpush1.msra.mxu0 %v504
    %609 = vmatprep.subr.mxu0 0.0
    %610 = vmatpush1.msra.mxu0 %v505
    %611 = vmatprep.subr.mxu0 0.0
    %612 = vmatpush1.msra.mxu0 %v506
    %613 = vmatprep.subr.mxu0 0.0
    %614 = vmatpush1.msra.mxu0 %v507
    %615 = vmatprep.subr.mxu0 0.0
    %616 = vmatpush1.msra.mxu0 %v508
    %617 = vmatprep.subr.mxu0 0.0
    %618 = vmatpush1.msra.mxu0 %v509
    %619 = vmatprep.subr.mxu0 0.0
    %620 = vmatpush1.msra.mxu0 %v510
    %621 = vmatprep.subr.mxu0 0.0
    %622 = vmatpush1.msra.mxu0 %v511
    %623 = vmatprep.subr.mxu0 0.0
    %624 = vmatpush1.msra.mxu0 %v512
    %625 = vmatprep.subr.mxu0 0.0
    %626 = vmatpush1.msra.mxu0 %v513
    %627 = vmatprep.subr.mxu0 0.0
    %628 = vmatpush1.msra.mxu0 %v514
    %629 = vmatprep.subr.mxu0 0.0
    %630 = vmatpush1.msra.mxu0 0.0
    %631 = vmatprep.subr.mxu0 0.0
    %632 = vmatpush1.msra.mxu0 0.0
    %633 = vmatprep.subr.mxu0 0.0
    %634 = vmatpush1.msra.mxu0 0.0
    %635 = vmatprep.subr.mxu0 0.0
    %636 = vmatpush1.msra.mxu0 0.0
    %637 = vmatprep.subr.mxu0 0.0
    %638 = vmatpush1.msra.mxu0 0.0
    %639 = vmatprep.subr.mxu0 0.0
    %640 = vmatpush1.msra.mxu0 0.0
    %641 = vmatprep.subr.mxu0 0.0
    %642 = vmatpush1.msra.mxu0 0.0
    %643 = vmatprep.subr.mxu0 0.0
    %644 = vmatpush1.msra.mxu0 0.0
    %645 = vmatprep.subr.mxu0 0.0
    %646 = vmatpush1.msra.mxu0 0.0
    %647 = vmatprep.subr.mxu0 0.0
    %648 = vmatpush1.msra.mxu0 0.0
    %649 = vmatprep.subr.mxu0 0.0
    %650 = vmatpush1.msra.mxu0 0.0
    %651 = vmatprep.subr.mxu0 0.0
    %652 = vmatpush1.msra.mxu0 0.0
    %653 = vmatprep.subr.mxu0 0.0
    %654 = vmatpush1.msra.mxu0 0.0
    %655 = vmatprep.subr.mxu0 0.0
    %656 = vmatpush1.msra.mxu0 0.0
    %657 = vmatprep.subr.mxu0 0.0
    %658 = vmatpush1.msra.mxu0 0.0
    %659 = vmatprep.subr.mxu0 0.0
    %660 = vmatpush1.msra.mxu0 0.0
    %661 = vmatprep.mubr.f32.mxu0 0.0
    %662 = vmatmul.mubr.f32.gmra.mrb[0].mxu0 %v463
    %v663 = vpop.f32.mrb[0].mxu0
    %v664 = vadd.f32 %v589, %v663
    %v665 = vpop.f32.mrb[0].mxu0
    %666 = vmatprep.mubr.f32.mxu0 0.0
    %667 = vmatmul.mubr.f32.gmra.mrb[0].mxu0 %v466
    %v668 = vpop.f32.mrb[0].mxu0
    %v669 = vadd.f32 %v594, %v668
    %v670 = vpop.f32.mrb[0].mxu0
    %671 = vdwg.mxu0
    %v672 = vmul.f32 %v453, %v664
    %v673 = vmul.f32 %v458, %v669
    %vm674 = vcmask 424960
    %675 = vst.msk [vmem:[#allocation2] sm:$0xff] %vm674, %v672
    %676 = vst.msk [vmem:[#allocation2 + $0x8] sm:$0xff] %vm674, %v673
    // Predicated region
    $region58: #{tpu_custom_call.1} parent=1 // pred_check
      _
    $region59: #{tpu_custom_call.1} parent=1 // pred_check_branch
      %678 = sbr.rel (0) target = $region61
    $region60: #{tpu_custom_call.1} parent=1 // pred_region
      %s680 = ssub.s32 256, 256
      %681 = vsyncadd [#allocation3], %s680
      %s682 = sshll.u32 [#allocation2], 4
      %s683 = int_to_ptr.vmem [resolvable:$true] %s682
      %688 = dma.vmem_to_hbm [thread:$0]  %s683, 256, %s14, [#allocation3], 128, 128, 8
    $region61: #{tpu_custom_call.1} parent=1 // pred_fallthru
      _
    // Predicated region
    $region62: #{tpu_custom_call.1} parent=1 // pred_check
      _
    $region63: #{tpu_custom_call.1} parent=1 // pred_check_branch
      %690 = sbr.rel (0) target = $region65
    $region64: #{tpu_custom_call.1} parent=1 // pred_region
      %691 = dma.done [#allocation3], 256
    $region65: #{tpu_custom_call.1} parent=1 // pred_fallthru
      _
    %692 = vsyncpa [#allocation3], 1

</llo_original>
